<compile_context>
chip_gen: v7x
topology: tpu7x:2x2x1
jax: 0.10.0
libtpu: 0.0.40
codegen_flags: <defaults>
</compile_context>

<pallas_src>
import functools

import jax
import jax.numpy as jnp
from jax import lax
from jax.experimental import pallas as pl
from jax.experimental.pallas import tpu as pltpu

_LANE = 128


def _round_up(n, m):
    return ((n + m - 1) // m) * m


@functools.lru_cache(maxsize=1)
def _vmem_limit_bytes():
    """Generation-aware scoped-VMEM limit: 64 MiB on v5e/v6e (128 MiB VMEM),
    32 MiB on v7x (64 MiB VMEM)."""
    cap = None
    try:
        info = pltpu.get_tpu_info()
        cap = getattr(info, "vmem_capacity_bytes", None)
    except Exception:
        cap = None
    if cap is not None and cap >= 100 * 1024 * 1024:
        return 64 * 1024 * 1024
    return 32 * 1024 * 1024


# ---------------------------------------------------------------------------
# Pallas kernels 1a/1b: decoder matmul  y = act(W1 @ X1 [+ W2 @ X2] + b)
#   Weights pre-padded + pre-cast to bf16 at init, activations bf16,
#   accumulation f32 in registers (no scratch), fused bias + activation,
#   output bf16 (or f32 for the last layer).
# ---------------------------------------------------------------------------
def _mm1_kernel(w_ref, x_ref, b_ref, o_ref, *, activation):
    r = jnp.dot(w_ref[...], x_ref[...], preferred_element_type=jnp.float32)
    r = r + b_ref[...]
    if activation == "relu":
        r = jnp.maximum(r, 0.0)
    o_ref[...] = r.astype(o_ref.dtype)


def _mm2_kernel(w1_ref, x1_ref, w2_ref, x2_ref, b_ref, o_ref, *, activation):
    r = jnp.dot(w1_ref[...], x1_ref[...], preferred_element_type=jnp.float32)
    r = r + jnp.dot(w2_ref[...], x2_ref[...], preferred_element_type=jnp.float32)
    r = r + b_ref[...]
    if activation == "relu":
        r = jnp.maximum(r, 0.0)
    o_ref[...] = r.astype(o_ref.dtype)


def prep_decoder_layer(w, b, k_segs):
    """Pre-split / pre-pad / pre-cast a decoder weight.

    w: (M, sum(k_true)) f32.  k_segs: list of (k_true, k_padded) per input
    segment (segment 1 = previous layer output, segment 2 = skip feature).
    Padded rows/columns are zero, so padded activations never contaminate the
    result.  Done once at init; the forward never re-pads/re-casts weights."""
    M = w.shape[0]
    Mp = _round_up(M, _LANE)
    segs = []
    off = 0
    for k_true, k_pad in k_segs:
        wseg = w[:, off:off + k_true]
        off += k_true
        wp = jnp.zeros((Mp, k_pad), jnp.bfloat16)
        wp = wp.at[:M, :k_true].set(wseg.astype(jnp.bfloat16))
        segs.append(wp)
    assert off == w.shape[1], (off, w.shape)
    bp = jnp.zeros((Mp, 1), jnp.float32).at[:M, 0].set(b.astype(jnp.float32))
    return {"w_segs": segs, "b": bp, "M": M, "Mp": Mp}


def pallas_decoder_layer(lp, xs, activation="relu", out_dtype=jnp.bfloat16):
    """xs: list of bf16 activation segments, each (K_pad_i, Tp) (already padded).
    Returns a PADDED (Mp, Tp) array of out_dtype; rows >= M are exact zeros."""
    segs = lp["w_segs"]
    assert len(xs) == len(segs) and len(segs) in (1, 2)
    Tp = xs[0].shape[1]
    Mp = lp["Mp"]
    tm = 256 if (Mp % 256 == 0 and Mp >= 512) else 128
    tn = 512 if Tp % 512 == 0 else 256
    assert Tp % tn == 0, (Tp, tn)
    grid = (Mp // tm, Tp // tn)

    if len(segs) == 1:
        kern = functools.partial(_mm1_kernel, activation=activation)
        k1 = segs[0].shape[1]
        assert xs[0].shape[0] == k1, (xs[0].shape, k1)
        in_specs = [
            pl.BlockSpec((tm, k1), lambda i, j: (i, 0)),   # weight (bf16)
            pl.BlockSpec((k1, tn), lambda i, j: (0, j)),   # activation (bf16)
            pl.BlockSpec((tm, 1), lambda i, j: (i, 0)),    # bias (f32)
        ]
        args = (segs[0], xs[0], lp["b"])
    else:
        kern = functools.partial(_mm2_kernel, activation=activation)
        k1, k2 = segs[0].shape[1], segs[1].shape[1]
        assert xs[0].shape[0] == k1 and xs[1].shape[0] == k2
        in_specs = [
            pl.BlockSpec((tm, k1), lambda i, j: (i, 0)),
            pl.BlockSpec((k1, tn), lambda i, j: (0, j)),
            pl.BlockSpec((tm, k2), lambda i, j: (i, 0)),
            pl.BlockSpec((k2, tn), lambda i, j: (0, j)),
            pl.BlockSpec((tm, 1), lambda i, j: (i, 0)),
        ]
        args = (segs[0], xs[0], segs[1], xs[1], lp["b"])

    return pl.pallas_call(
        kern,
        out_shape=jax.ShapeDtypeStruct((Mp, Tp), out_dtype),
        grid=grid,
        in_specs=in_specs,
        out_specs=pl.BlockSpec((tm, tn), lambda i, j: (i, j)),
        compiler_params=pltpu.CompilerParams(
            dimension_semantics=("parallel", "parallel"),
            vmem_limit_bytes=_vmem_limit_bytes()),
    )(*args)


# ---------------------------------------------------------------------------
# Pallas kernels 2a/2b: chunked two-pass InstanceNorm (+ optional fused ReLU)
#   Pass 1: per-channel sum / sumsq accumulated in f32 over S chunks.
#   Pass 2: normalize (+ ReLU) over the same chunks.
# ---------------------------------------------------------------------------
def _in_stats_kernel(x_ref, sum_ref, sq_ref):
    s = pl.program_id(1)

    @pl.when(s == 0)
    def _():
        sum_ref[...] = jnp.zeros_like(sum_ref)
        sq_ref[...] = jnp.zeros_like(sq_ref)

    x = x_ref[...].astype(jnp.float32)
    sum_ref[...] += jnp.sum(x, axis=1, keepdims=True)
    sq_ref[...] += jnp.sum(x * x, axis=1, keepdims=True)


def _in_norm_kernel(x_ref, mean_ref, rstd_ref, o_ref, *, relu):
    y = (x_ref[...] - mean_ref[...]) * rstd_ref[...]
    if relu:
        y = jnp.maximum(y, 0.0)
    o_ref[...] = y.astype(o_ref.dtype)


def _pick_chunk(S, cap=16384):
    if S % _LANE != 0:
        return S                       # small spatial extent: full-S block
    c = min(S, cap)
    while S % c != 0:
        c -= _LANE
    return c


def pallas_instance_norm(x2d, relu=False, eps=1e-5):
    """x2d: (C, S) f32. Per-row normalize over S (biased variance, eps=1e-5)."""
    C, S = x2d.shape
    rows = 8 if C % 8 == 0 else C
    chunk = _pick_chunk(S)
    grid = (C // rows, S // chunk)
    vlim = _vmem_limit_bytes()

    ssum, ssq = pl.pallas_call(
        _in_stats_kernel,
        out_shape=(jax.ShapeDtypeStruct((C, 1), jnp.float32),
                   jax.ShapeDtypeStruct((C, 1), jnp.float32)),
        grid=grid,
        in_specs=[pl.BlockSpec((rows, chunk), lambda i, s: (i, s))],
        out_specs=(pl.BlockSpec((rows, 1), lambda i, s: (i, 0)),
                   pl.BlockSpec((rows, 1), lambda i, s: (i, 0))),
        compiler_params=pltpu.CompilerParams(
            dimension_semantics=("parallel", "arbitrary"),
            vmem_limit_bytes=vlim),
    )(x2d)

    # Tiny (C, 1) scalar math in plain JAX.  Biased variance as in
    # nn.InstanceNorm3d.  NOTE: sumsq - mean^2 in f32; accumulation is f32 and
    # inputs are roughly zero-mean post-conv, clamp guards tiny negatives.
    mean = ssum / S
    var = jnp.maximum(ssq / S - mean * mean, 0.0)
    rstd = lax.rsqrt(var + eps)

    return pl.pallas_call(
        functools.partial(_in_norm_kernel, relu=relu),
        out_shape=jax.ShapeDtypeStruct((C, S), x2d.dtype),
        grid=grid,
        in_specs=[pl.BlockSpec((rows, chunk), lambda i, s: (i, s)),
                  pl.BlockSpec((rows, 1), lambda i, s: (i, 0)),
                  pl.BlockSpec((rows, 1), lambda i, s: (i, 0))],
        out_specs=pl.BlockSpec((rows, chunk), lambda i, s: (i, s)),
        compiler_params=pltpu.CompilerParams(
            dimension_semantics=("parallel", "parallel"),
            vmem_limit_bytes=vlim),
    )(x2d, mean, rstd)


# ---------------------------------------------------------------------------
# Plain-JAX glue
# ---------------------------------------------------------------------------
def conv3d_same(x, wb):
    """3x3x3 'same' conv, stride 1.  No im2col materialization: lowered to
    XLA's native TPU conv (review-sanctioned fallback)."""
    w, b = wb                                   # (Cout, Cin, 3, 3, 3), (Cout,)
    y = lax.conv_general_dilated(
        x[None], w, window_strides=(1, 1, 1), padding=((1, 1),) * 3,
        dimension_numbers=("NCDHW", "OIDHW", "NCDHW"),
        preferred_element_type=jnp.float32)[0]
    return y + b[:, None, None, None]


def conv_block_2_3d_apply(x, params):
    """conv -> InstanceNorm -> ReLU -> conv -> InstanceNorm."""
    l1, l2 = params
    y = conv3d_same(x, l1)
    C, D, H, W = y.shape
    y = pallas_instance_norm(y.reshape(C, -1), relu=True).reshape(C, D, H, W)
    y = conv3d_same(y, l2)
    y = pallas_instance_norm(y.reshape(C, -1), relu=False).reshape(C, D, H, W)
    return y


def maxpool3d_2(x):
    C, D, H, W = x.shape
    return x.reshape(C, D // 2, 2, H // 2, 2, W // 2, 2).max(axis=(2, 4, 6))


def grid_sample_3d(vol, grid):
    """Trilinear grid_sample, align_corners=True, zeros padding.
    vol: (C, D, H, W)  grid: (G, T, 3) with (x, y, z) in [-1, 1] -> (C, G, T)."""
    # TODO(synk): replace the jnp.take gather with a Pallas scalar-prefetch
    # gather kernel (indices in SMEM) for the full-resolution level at large T.
    C, D, H, W = vol.shape
    x, y, z = grid[..., 0], grid[..., 1], grid[..., 2]
    ix = (x + 1.0) * 0.5 * (W - 1)
    iy = (y + 1.0) * 0.5 * (H - 1)
    iz = (z + 1.0) * 0.5 * (D - 1)
    ix0, iy0, iz0 = jnp.floor(ix), jnp.floor(iy), jnp.floor(iz)
    ix1, iy1, iz1 = ix0 + 1.0, iy0 + 1.0, iz0 + 1.0
    wx1, wy1, wz1 = ix - ix0, iy - iy0, iz - iz0
    wx0, wy0, wz0 = 1.0 - wx1, 1.0 - wy1, 1.0 - wz1
    vol_flat = vol.reshape(C, D * H * W)

    def corner(zc, yc, xc):
        valid = ((zc >= 0) & (zc <= D - 1) & (yc >= 0) & (yc <= H - 1)
                 & (xc >= 0) & (xc <= W - 1))
        zi = jnp.clip(zc, 0, D - 1).astype(jnp.int32)
        yi = jnp.clip(yc, 0, H - 1).astype(jnp.int32)
        xi = jnp.clip(xc, 0, W - 1).astype(jnp.int32)
        idx = (zi * H + yi) * W + xi
        vals = jnp.take(vol_flat, idx.reshape(-1), axis=1)
        vals = vals.reshape((C,) + idx.shape)
        return vals * valid.astype(vol.dtype)

    out = jnp.zeros((C,) + ix.shape, vol.dtype)
    for zc, wz in ((iz0, wz0), (iz1, wz1)):
        for yc, wy in ((iy0, wy0), (iy1, wy1)):
            for xc, wx in ((ix0, wx0), (ix1, wx1)):
                out = out + corner(zc, yc, xc) * (wz * wy * wx)
    return out


def _prep_activation(a, rows_p, cols_p):
    """Pad (rows -> rows_p, cols -> cols_p) with zeros and cast to bf16 ONCE."""
    r, n = a.shape
    out = jnp.zeros((rows_p, cols_p), jnp.bfloat16)
    return out.at[:r, :n].set(a.astype(jnp.bfloat16))


# ---------------------------------------------------------------------------
# Parameters (deterministic synthetic init — not a checkpoint load)
# Decoder weights are pre-split / pre-padded / pre-cast to bf16 once here.
# ---------------------------------------------------------------------------
def init_params(key):
    keys = iter(jax.random.split(key, 64))

    def conv3d_p(cin, cout):
        fan = cin * 27
        w = jax.random.normal(next(keys), (cout, cin, 3, 3, 3),
                              jnp.float32) / jnp.sqrt(fan)
        b = jax.random.normal(next(keys), (cout,), jnp.float32) * 0.01
        return (w, b)

    def dense_p(cin, cout):
        # weight_norm at init: w = g * v / ||v|| with g = ||v||  ->  w == v
        w = jax.random.normal(next(keys), (cout, cin),
                              jnp.float32) / jnp.sqrt(cin)
        b = jax.random.normal(next(keys), (cout,), jnp.float32) * 0.01
        return (w, b)

    p = {}
    for name, (ci, co) in zip(
            ["down_1", "down_2", "down_3", "down_4", "down_5"],
            [(1, 16), (16, 32), (32, 64), (64, 128), (128, 128)]):
        p[name] = (conv3d_p(ci, co), conv3d_p(co, co))

    p["fc"] = dense_p(128, 512)            # Linear on the pooled vector (N=1)

    def dec(cin_segs, cout, kpad_segs):
        w, b = dense_p(sum(cin_segs), cout)
        return prep_decoder_layer(w, b, list(zip(cin_segs, kpad_segs)))

    # Padded K sizes must match what the forward feeds: segment 1 = previous
    # layer's padded output (Mp), segment 2 = round_up(C*27, 128) skip feature.
    lp1 = dec([3456], 1728, [3456])
    lp2 = dec([1728, 3456], 2592, [lp1["Mp"], 3456])
    lp3 = dec([2592, 1728], 2160, [lp2["Mp"], _round_up(1728, _LANE)])
    lp4 = dec([2160, 864], 1512, [lp3["Mp"], _round_up(864, _LANE)])
    lp5 = dec([1512, 432], 972, [lp4["Mp"], _round_up(432, _LANE)])
    lp6 = dec([972, 27], 1021, [lp5["Mp"], _round_up(27, _LANE)])
    lpo0 = dec([1021, 3], 2048, [lp6["Mp"], _round_up(3, _LANE)])
    lpo1 = dec([2048], 4096, [2048])
    p.update({"fc_1": lp1, "fc_2": lp2, "fc_3": lp3, "fc_4": lp4,
              "fc_5": lp5, "fc_6": lp6, "fc_out_0": lpo0, "fc_out_1": lpo1})
    p["fc_out_2"] = dense_p(4096, 1)       # M=1: plain-JAX VPU dot + tanh
    return p


# ---------------------------------------------------------------------------
# MISNeR forward
# ---------------------------------------------------------------------------
def misner_forward(params, x, p):
    """x: (1, 1, D, H, W) volume;  p: (1, T, 3) query points in [-1, 1]."""
    N, _, D, H, W = x.shape
    assert N == 1, "decoder head (repeat/reshape) requires batch size 1"
    T = p.shape[1]
    Tp = _round_up(T, 256)           # lane-dense, tn>=256 for v6e/v7x MXUs

    disp = 2.0 / 127.0
    displacements = jnp.array(
        [[i * disp, j * disp, k * disp]
         for i in (-1, 0, 1) for j in (-1, 0, 1) for k in (-1, 0, 1)],
        jnp.float32)                                          # (27, 3)

    p_features = jnp.transpose(p, (0, 2, 1))                  # (1, 3, T)
    pg = p[0][None, :, :] + displacements[:, None, :]         # (27, T, 3)

    def feat(vol):
        c = vol.shape[0]
        return grid_sample_3d(vol, pg).reshape(c * 27, T)

    vol0 = x[0]                                               # (1, D, H, W)
    feature_0 = feat(vol0)                                    # (27, T)

    net = conv_block_2_3d_apply(vol0, params["down_1"])
    feature_1 = feat(net)                                     # (432, T)
    net = maxpool3d_2(net)
    net = conv_block_2_3d_apply(net, params["down_2"])
    feature_2 = feat(net)                                     # (864, T)
    net = maxpool3d_2(net)
    net = conv_block_2_3d_apply(net, params["down_3"])
    feature_3 = feat(net)                                     # (1728, T)
    net = maxpool3d_2(net)
    net = conv_block_2_3d_apply(net, params["down_4"])
    feature_4 = feat(net)                                     # (3456, T)
    net = maxpool3d_2(net)
    net = conv_block_2_3d_apply(net, params["down_5"])
    feature_5 = feat(net)                                     # (3456, T)

    # AdaptiveAvgPool3d((1,1,1)) + Linear(128, 512): tiny mat-vec -> plain JAX
    vec = net.mean(axis=(1, 2, 3))                            # (128,)
    wf, bf = params["fc"]
    vec = wf @ vec + bf                                       # (512,)
    # Matches the original `.view(B,1,512).repeat(1,10000,1).reshape(512,-1)`
    # exactly (parametrized by T instead of the hard-coded 10000). NOTE: as in
    # the PyTorch reference, this row-major reshape is intentionally NOT a
    # transpose.
    vecs = jnp.tile(vec.reshape(1, 1, 512), (1, T, 1)).reshape(512, -1)[None]
    vecs = jnp.concatenate([p_features, vecs], axis=1)        # (1, 515, T)

    # Skip features: pad rows to 128-multiples / cols to Tp and cast to bf16
    # ONCE.  Decoder intermediates stay padded bf16; skip connections are
    # handled as a second K segment inside the Pallas kernel (no concats).
    f5 = _prep_activation(feature_5, 3456, Tp)
    f4 = _prep_activation(feature_4, 3456, Tp)
    f3 = _prep_activation(feature_3, _round_up(1728, _LANE), Tp)
    f2 = _prep_activation(feature_2, _round_up(864, _LANE), Tp)
    f1 = _prep_activation(feature_1, _round_up(432, _LANE), Tp)
    f0 = _prep_activation(feature_0, _round_up(27, _LANE), Tp)
    pf = _prep_activation(p_features[0], _round_up(3, _LANE), Tp)

    net1 = pallas_decoder_layer(params["fc_1"], [f5], "relu")
    net1 = pallas_decoder_layer(params["fc_2"], [net1, f4], "relu")
    net1 = pallas_decoder_layer(params["fc_3"], [net1, f3], "relu")
    net1 = pallas_decoder_layer(params["fc_4"], [net1, f2], "relu")
    net1 = pallas_decoder_layer(params["fc_5"], [net1, f1], "relu")
    net1 = pallas_decoder_layer(params["fc_6"], [net1, f0], "relu")
    net1 = pallas_decoder_layer(params["fc_out_0"], [net1, pf], "relu")
    net1 = pallas_decoder_layer(params["fc_out_1"], [net1], "relu",
                                out_dtype=jnp.float32)        # (4096, Tp) f32

    # fc_out_2 has a single output channel: padding M=1 to an MXU tile is 128x
    # waste, so compute the 4096-long dot per point on the VPU in plain JAX.
    w2, b2 = params["fc_out_2"]
    out_full = jnp.tanh(w2 @ net1 + b2[:, None])              # (1, Tp)
    out = jnp.transpose(out_full[:, :T], (1, 0))              # (T, 1)
    return out, vecs


# ---------------------------------------------------------------------------
if __name__ == "__main__":
    key = jax.random.PRNGKey(0)
    kp, kx, kq = jax.random.split(key, 3)

    params = init_params(kp)

    # 16^3 volume -> 1^3 after four maxpools (so feature_5 has 128*27 = 3456
    # rows).  T=256 query points keeps the decoder lanes dense (Tp % 256 == 0).
    T = 256
    x = jax.random.normal(kx, (1, 1, 16, 16, 16), jnp.float32)
    p = jax.random.uniform(kq, (1, T, 3), jnp.float32, minval=-1.0, maxval=1.0)

    out, vecs = misner_forward(params, x, p)
    out = jax.block_until_ready(out)
    vecs = jax.block_until_ready(vecs)

    assert out.shape == (T, 1), out.shape
    assert vecs.shape == (1, 515, T), vecs.shape
    assert bool(jnp.all(jnp.isfinite(out))) and bool(jnp.all(jnp.isfinite(vecs)))
    print("KERNEL_OK")
</pallas_src>

<mosaic_0001>
module attributes {stable_mosaic.version = 11 : i64} {
  func.func @_in_stats_kernel(%arg0: i32, %arg1: i32, %arg2: memref<8x4096xf32, #tpu.memory_space<vmem>>, %arg3: memref<8x1xf32, #tpu.memory_space<vmem>>, %arg4: memref<8x1xf32, #tpu.memory_space<vmem>>) attributes {dimension_semantics = [#tpu.dimension_semantics<parallel>, #tpu.dimension_semantics<arbitrary>], iteration_bounds = array<i64: 2, 1>, scalar_prefetch = 0 : i64, scratch_operands = 0 : i64, tpu.core_type = #tpu.core_type<tc>, window_params = [{transform_indices = @transform_0, window_bounds = array<i64: 8, 4096>}, {transform_indices = @transform_1, window_bounds = array<i64: 8, 1>}, {transform_indices = @transform_2, window_bounds = array<i64: 8, 1>}]} {
    %c0_i32 = arith.constant 0 : i32
    %0 = arith.cmpi eq, %arg1, %c0_i32 : i32
    %1 = arith.extui %0 : i1 to i32
    %c0_i32_0 = arith.constant 0 : i32
    %2 = arith.cmpi ne, %1, %c0_i32_0 : i32
    scf.if %2 {
      %cst_11 = arith.constant 0.000000e+00 : f32
      %15 = vector.broadcast %cst_11 : f32 to vector<8x1xf32>
      %c0_12 = arith.constant 0 : index
      %c0_13 = arith.constant 0 : index
      %16 = vector.load %arg3[%c0_12, %c0_13] : memref<8x1xf32, #tpu.memory_space<vmem>>, vector<8x1xf32>
      tpu.vector_store %arg3[%c0_12, %c0_13], %15 {strides = array<i32>} : memref<8x1xf32, #tpu.memory_space<vmem>>, vector<8x1xf32>,
      %cst_14 = arith.constant 0.000000e+00 : f32
      %17 = vector.broadcast %cst_14 : f32 to vector<8x1xf32>
      %c0_15 = arith.constant 0 : index
      %c0_16 = arith.constant 0 : index
      %18 = vector.load %arg4[%c0_15, %c0_16] : memref<8x1xf32, #tpu.memory_space<vmem>>, vector<8x1xf32>
      tpu.vector_store %arg4[%c0_15, %c0_16], %17 {strides = array<i32>} : memref<8x1xf32, #tpu.memory_space<vmem>>, vector<8x1xf32>,
    } else {
    }
    %c0 = arith.constant 0 : index
    %c0_1 = arith.constant 0 : index
    %3 = vector.load %arg2[%c0, %c0_1] : memref<8x4096xf32, #tpu.memory_space<vmem>>, vector<8x4096xf32>
    %c0_2 = arith.constant 0 : index
    %c0_3 = arith.constant 0 : index
    %4 = vector.load %arg3[%c0_2, %c0_3] : memref<8x1xf32, #tpu.memory_space<vmem>>, vector<8x1xf32>
    %cst = arith.constant dense<0.000000e+00> : vector<8xf32>
    %5 = vector.multi_reduction <add>, %3, %cst [1] : vector<8x4096xf32> to vector<8xf32>
    %6 = vector.shape_cast %5 : vector<8xf32> to vector<8x1xf32>
    %7 = arith.addf %4, %6 : vector<8x1xf32>
    %c0_4 = arith.constant 0 : index
    %c0_5 = arith.constant 0 : index
    %8 = vector.load %arg3[%c0_4, %c0_5] : memref<8x1xf32, #tpu.memory_space<vmem>>, vector<8x1xf32>
    tpu.vector_store %arg3[%c0_4, %c0_5], %7 {strides = array<i32>} : memref<8x1xf32, #tpu.memory_space<vmem>>, vector<8x1xf32>,
    %c0_6 = arith.constant 0 : index
    %c0_7 = arith.constant 0 : index
    %9 = vector.load %arg4[%c0_6, %c0_7] : memref<8x1xf32, #tpu.memory_space<vmem>>, vector<8x1xf32>
    %10 = arith.mulf %3, %3 : vector<8x4096xf32>
    %cst_8 = arith.constant dense<0.000000e+00> : vector<8xf32>
    %11 = vector.multi_reduction <add>, %10, %cst_8 [1] : vector<8x4096xf32> to vector<8xf32>
    %12 = vector.shape_cast %11 : vector<8xf32> to vector<8x1xf32>
    %13 = arith.addf %9, %12 : vector<8x1xf32>
    %c0_9 = arith.constant 0 : index
    %c0_10 = arith.constant 0 : index
    %14 = vector.load %arg4[%c0_9, %c0_10] : memref<8x1xf32, #tpu.memory_space<vmem>>, vector<8x1xf32>
    tpu.vector_store %arg4[%c0_9, %c0_10], %13 {strides = array<i32>} : memref<8x1xf32, #tpu.memory_space<vmem>>, vector<8x1xf32>,
    return
  }
  func.func @transform_0(%arg0: i32, %arg1: i32) -> (i32, i32) {
    %c0_i32 = arith.constant 0 : i32
    return %arg0, %arg1 : i32, i32
  }
  func.func @transform_1(%arg0: i32, %arg1: i32) -> (i32, i32) {
    %c0_i32 = arith.constant 0 : i32
    %c0_i32_0 = arith.constant 0 : i32
    return %arg0, %c0_i32 : i32, i32
  }
  func.func @transform_2(%arg0: i32, %arg1: i32) -> (i32, i32) {
    %c0_i32 = arith.constant 0 : i32
    %c0_i32_0 = arith.constant 0 : i32
    return %arg0, %c0_i32 : i32, i32
  }
}

</mosaic_0001>

<llo_original>
// kernel: tpu_custom_call.1
$region0: #{tpu_custom_call.1}
  #allocation0 [shape = 'u32[]', space=smem, size = 0x4, offset = 0x4, fixed_abs, tag = 'smem constant byte address 0x4 - core index']
  #allocation1 [shape = 'u32[144,128]{1,0:T(1,128)}', space=vmem, size = 0x12000, scoped, tag = 'internal scratch']
  %s0 = inlined_call_operand.hbm [shape: f32[16,4096], index: 0, kind: input, shape index: {}]
  %s1 = inlined_call_operand.vmem [shape: f32[16,1], index: 1, kind: output, shape index: {0}]
  %s2 = inlined_call_operand.vmem [shape: f32[16,1], index: 2, kind: output, shape index: {1}]
  %3 = xla_tuple %s1, %s2
  %s4 = sld [smem:[#allocation0]]
  $region53: #{tpu_custom_call.1} parent=0
    _
  %s6 = ssub.s32 1, %s4
  %s7 = scalar_select 0, %s6, %s4
  $region1: #{tpu_custom_call.1} parent=0
    #allocation2 [shape = 'u8[262144]{0}', space=vmem, size = 0x40000, scoped, tag = 'input window, operand 0']
    #allocation3 [shape = 's32[2]{0}', space=sflag, size = 0x8, scoped, tag = 'scoped memory for tpu_custom_call.1']
    %8 = vsyncpa [#allocation3], 0
    %s9 = scalar_lea.sflag [#allocation3], 1
    %10 = vsyncpa %s9, 0
    loop: start=0, step=1, limit=4
    $region2: #{tpu_custom_call.1} parent=1 // loop_pre_header
      _
    $region3: #{tpu_custom_call.1} parent=1 // loop_header
      %s12 = sphi 0, %s16
      %p13 = scmp.ge.s32.totalorder %s12, 4
      %s19 = sphi 0, %s31
      %s20 = sphi 0, %s27
      %s21 = sphi 0, %s19
      %s22 = sphi 0, %s20
      %s23 = sphi 0, %s21
      %s24 = sphi 0, %s22
      %s36 = sphi 0, %s38
      %s39 = sphi 0, %s36
      %s40 = sphi 0, %s39
      %s56 = sphi 0, %s40
      %s62 = sphi 0, %s64
      %s65 = sphi 0, %s62
      %s66 = sphi 0, %s65
      %s82 = sphi 0, %s66
      %s88 = sphi 0, %s90
      %s91 = sphi 0, %s88
      %s92 = sphi 0, %s91
      %s108 = sphi 0, %s92
    $region4: #{tpu_custom_call.1} parent=1 // loop_header_branch
      %15 = sbr.rel (%p13) target = $region8
    $region5: #{tpu_custom_call.1} parent=1 // loop_body
      %s17 = ssub.s32 %s12, 1
      %s18 = ssub.s32 %s12, 2
      %s25 = sadd.s32 1, %s20
      %p26 = scmp.ge.s32.totalorder %s25, 1
      %s27 = scalar_select %p26, 0, %s25
      %s28 = sadd.s32 1, %s19
      %s29 = scalar_select %p26, %s28, %s19
      %p30 = scmp.ge.s32.totalorder %s29, 2
      %s31 = scalar_select %p30, 0, %s29
      %s32 = ssub.s32 %s19, %s31
      %s33 = ssub.s32 %s20, %s27
      %s34 = sor.u32 %s32, %s33
      %p35 = scmp.eq.s32.totalorder %s34, 0
      %s37 = sadd.s32 %s36, 1
      %s38 = scalar_select %p35, %s36, %s37
      %p41 = pneg %p35
      %p42 = scmp.eq.s32.totalorder %s12, 1
      %p43 = por %p41, %p42
      %p44 = scmp.ne.s32.totalorder %s36, %s39
      %p45 = scmp.eq.s32.totalorder %s12, 0
      %p46 = por %p44, %p45
      %p47 = scmp.ne.s32.totalorder %s36, %s39
      %p48 = scmp.eq.s32.totalorder %s17, 1
      %p49 = por %p47, %p48
      %p50 = scmp.ne.s32.totalorder %s39, %s40
      %p51 = scmp.eq.s32.totalorder %s17, 0
      %p52 = por %p50, %p51
      %p53 = scmp.ne.s32.totalorder %s39, %s40
      %p54 = scmp.eq.s32.totalorder %s18, 1
      %p55 = por %p53, %p54
      %p57 = scmp.ne.s32.totalorder %s40, %s56
      %p58 = scmp.eq.s32.totalorder %s18, 0
      %p59 = por %p57, %p58
      %s60 = ssub.s32 %s19, %s31
      %p61 = scmp.eq.s32.totalorder %s60, 0
      %s63 = sadd.s32 %s62, 1
      %s64 = scalar_select %p61, %s62, %s63
      %p67 = pneg %p61
      %p68 = scmp.eq.s32.totalorder %s12, 1
      %p69 = por %p67, %p68
      %p70 = scmp.ne.s32.totalorder %s62, %s65
      %p71 = scmp.eq.s32.totalorder %s12, 0
      %p72 = por %p70, %p71
      %p73 = scmp.ne.s32.totalorder %s62, %s65
      %p74 = scmp.eq.s32.totalorder %s17, 1
      %p75 = por %p73, %p74
      %p76 = scmp.ne.s32.totalorder %s65, %s66
      %p77 = scmp.eq.s32.totalorder %s17, 0
      %p78 = por %p76, %p77
      %p79 = scmp.ne.s32.totalorder %s65, %s66
      %p80 = scmp.eq.s32.totalorder %s18, 1
      %p81 = por %p79, %p80
      %p83 = scmp.ne.s32.totalorder %s66, %s82
      %p84 = scmp.eq.s32.totalorder %s18, 0
      %p85 = por %p83, %p84
      %s86 = ssub.s32 %s19, %s31
      %p87 = scmp.eq.s32.totalorder %s86, 0
      %s89 = sadd.s32 %s88, 1
      %s90 = scalar_select %p87, %s88, %s89
      %p93 = pneg %p87
      %p94 = scmp.eq.s32.totalorder %s12, 1
      %p95 = por %p93, %p94
      %p96 = scmp.ne.s32.totalorder %s88, %s91
      %p97 = scmp.eq.s32.totalorder %s12, 0
      %p98 = por %p96, %p97
      %p99 = scmp.ne.s32.totalorder %s88, %s91
      %p100 = scmp.eq.s32.totalorder %s17, 1
      %p101 = por %p99, %p100
      %p102 = scmp.ne.s32.totalorder %s91, %s92
      %p103 = scmp.eq.s32.totalorder %s17, 0
      %p104 = por %p102, %p103
      %p105 = scmp.ne.s32.totalorder %s91, %s92
      %p106 = scmp.eq.s32.totalorder %s18, 1
      %p107 = por %p105, %p106
      %p109 = scmp.ne.s32.totalorder %s92, %s108
      %p110 = scmp.eq.s32.totalorder %s18, 0
      %p111 = por %p109, %p110
      %p112 = scmp.le.s32.totalorder 1, %s12
      %p113 = scmp.lt.s32.totalorder %s12, 3
      %p114 = pnand %p112, %p113
      %p115 = pneg %p114
      // Predicated region
      $region9: #{tpu_custom_call.1} parent=5 // pred_check
        _
      $region10: #{tpu_custom_call.1} parent=5 // pred_check_branch
        %117 = sbr.rel (%p114) target = $region12
      $region11: #{tpu_custom_call.1} parent=5 // pred_region
        %s118 = ssub.s32 %s12, 1
      $region12: #{tpu_custom_call.1} parent=5 // pred_fallthru
        _
      %p119 = scmp.lt.s32.totalorder %s12, 2
      // Predicated region
      $region13: #{tpu_custom_call.1} parent=5 // pred_check
        %p120 = pneg %p119
      $region14: #{tpu_custom_call.1} parent=5 // pred_check_branch
        %122 = sbr.rel (%p120) target = $region16
      $region15: #{tpu_custom_call.1} parent=5 // pred_region
        // Predicated region
        $region17: #{tpu_custom_call.1} parent=15 // pred_check
          %p123 = pneg %p46
        $region18: #{tpu_custom_call.1} parent=15 // pred_check_branch
          %125 = sbr.rel (%p123) target = $region20
        $region19: #{tpu_custom_call.1} parent=15 // pred_region
          %s126 = sand.u32 %s36, 1
          %s127 = scalar_lea.sflag [#allocation3], %s126
          %s128 = sand.u32 %s36, 1
          %s129 = smul.addr %s128, 256
          %s130 = scalar_lea.vmem [#allocation2], %s129
          %s131 = smul.u32 32, %s20
          %s133 = ssub.s32 4096, 4096
          %134 = vsyncadd %s127, %s133
          %s135 = smul.addr %s19, 32
          %s136 = sadd.s32 %s131, %s135
          %s137 = smul.addr %s136, 128
          %s138 = scalar_lea.hbm %s0, %s137
          %s140 = sshll.u32 %s130, 4
          %s141 = int_to_ptr.vmem [resolvable:$true] %s140
          %143 = dma.hbm_to_vmem [thread:$0]  %s138, 4096, %s141, %s127
        $region20: #{tpu_custom_call.1} parent=15 // pred_fallthru
          _
      $region16: #{tpu_custom_call.1} parent=5 // pred_fallthru
        _
      %p144 = scmp.le.s32.totalorder 1, %s12
      %p145 = scmp.lt.s32.totalorder %s12, 3
      %p146 = pnand %p144, %p145
      %p147 = pneg %p146
      // Predicated region
      $region21: #{tpu_custom_call.1} parent=5 // pred_check
        _
      $region22: #{tpu_custom_call.1} parent=5 // pred_check_branch
        %149 = sbr.rel (%p146) target = $region24
      $region23: #{tpu_custom_call.1} parent=5 // pred_region
        %s150 = ssub.s32 %s12, 1
        %s151 = sand.u32 %s39, 1
        %s152 = scalar_lea.sflag [#allocation3], %s151
        %s153 = sand.u32 %s39, 1
        %s154 = smul.addr %s153, 256
        %s155 = scalar_lea.vmem [#allocation2], %s154
        // Predicated region
        $region25: #{tpu_custom_call.1} parent=23 // pred_check
          %p156 = pneg %p52
        $region26: #{tpu_custom_call.1} parent=23 // pred_check_branch
          %158 = sbr.rel (%p156) target = $region28
        $region27: #{tpu_custom_call.1} parent=23 // pred_region
          %159 = dma.done %s152, 4096
        $region28: #{tpu_custom_call.1} parent=23 // pred_fallthru
          _
        %s160 = sand.u32 %s39, 1
        %s161 = scalar_lea.sflag [#allocation3], %s160
        %s162 = sand.u32 %s39, 1
        %s163 = smul.addr %s162, 256
        %s164 = scalar_lea.vmem [#allocation2], %s163
        %p165 = pneg %p52
        %p166 = pneg %p49
        %p167 = pneg %p78
        %p168 = pneg %p75
        %p169 = scmp.lt.s32.totalorder %s21, 1
        %s170 = scalar_select %p169, %s21, 1
        %s171 = smul.addr %s170, 8
        %s172 = scalar_lea.vmem %s1, %s171
        %p173 = pneg %p104
        %p174 = pneg %p101
        %p175 = scmp.lt.s32.totalorder %s21, 1
        %s176 = scalar_select %p175, %s21, 1
        %s177 = smul.addr %s176, 8
        %s178 = scalar_lea.vmem %s2, %s177
        %s179 = smul.u32 32, %s22
        %p180 = scmp.lt.s32.totalorder %s21, 1
        %s181 = scalar_select %p180, %s21, 1
        %s182 = smul.addr %s181, 8
        %s183 = scalar_lea.vmem %s1, %s182
        %p184 = scmp.lt.s32.totalorder %s21, 1
        %s185 = scalar_select %p184, %s21, 1
        %s186 = smul.addr %s185, 8
        %s187 = scalar_lea.vmem %s2, %s186
        %p188 = scmp.eq.s32.totalorder %s22, 0
        // Predicated region
        $region29: #{tpu_custom_call.1} parent=23 // pred_check
          %p189 = pneg %p188
        $region30: #{tpu_custom_call.1} parent=23 // pred_check_branch
          %191 = sbr.rel (%p189) target = $region32
        $region31: #{tpu_custom_call.1} parent=23 // pred_region
          %vm192 = vcmask 7168
          %193 = vst.msk [vmem:[%s183] sm:$0xff] %vm192, 0.0
          %194 = vst.msk [vmem:[%s187] sm:$0xff] %vm192, 0.0
        $region32: #{tpu_custom_call.1} parent=23 // pred_fallthru
          _
        %v195 = vld [vmem:[%s155] sm:$0xff]
        %v196 = vld [vmem:[%s155 + $0x8] sm:$0xff]
        %v197 = vld [vmem:[%s155 + $0x10] sm:$0xff]
        %v198 = vld [vmem:[%s155 + $0x18] sm:$0xff]
        %v199 = vld [vmem:[%s155 + $0x20] sm:$0xff]
        %v200 = vld [vmem:[%s155 + $0x28] sm:$0xff]
        %v201 = vld [vmem:[%s155 + $0x30] sm:$0xff]
        %v202 = vld [vmem:[%s155 + $0x38] sm:$0xff]
        %v203 = vld [vmem:[%s155 + $0x40] sm:$0xff]
        %v204 = vld [vmem:[%s155 + $0x48] sm:$0xff]
        %v205 = vld [vmem:[%s155 + $0x50] sm:$0xff]
        %v206 = vld [vmem:[%s155 + $0x58] sm:$0xff]
        %v207 = vld [vmem:[%s155 + $0x60] sm:$0xff]
        %v208 = vld [vmem:[%s155 + $0x68] sm:$0xff]
        %v209 = vld [vmem:[%s155 + $0x70] sm:$0xff]
        %v210 = vld [vmem:[%s155 + $0x78] sm:$0xff]
        %v211 = vld [vmem:[%s155 + $0x80] sm:$0xff]
        %v212 = vld [vmem:[%s155 + $0x88] sm:$0xff]
        %v213 = vld [vmem:[%s155 + $0x90] sm:$0xff]
        %v214 = vld [vmem:[%s155 + $0x98] sm:$0xff]
        %v215 = vld [vmem:[%s155 + $0xa0] sm:$0xff]
        %v216 = vld [vmem:[%s155 + $0xa8] sm:$0xff]
        %v217 = vld [vmem:[%s155 + $0xb0] sm:$0xff]
        %v218 = vld [vmem:[%s155 + $0xb8] sm:$0xff]
        %v219 = vld [vmem:[%s155 + $0xc0] sm:$0xff]
        %v220 = vld [vmem:[%s155 + $0xc8] sm:$0xff]
        %v221 = vld [vmem:[%s155 + $0xd0] sm:$0xff]
        %v222 = vld [vmem:[%s155 + $0xd8] sm:$0xff]
        %v223 = vld [vmem:[%s155 + $0xe0] sm:$0xff]
        %v224 = vld [vmem:[%s155 + $0xe8] sm:$0xff]
        %v225 = vld [vmem:[%s155 + $0xf0] sm:$0xff]
        %v226 = vld [vmem:[%s155 + $0xf8] sm:$0xff]
        %v227 = vld [vmem:[%s183] sm:$0xff]
        %v228 = vadd.f32 %v195, %v196
        %v229 = vadd.f32 %v228, %v197
        %v230 = vadd.f32 %v229, %v198
        %v231 = vadd.f32 %v230, %v199
        %v232 = vadd.f32 %v231, %v200
        %v233 = vadd.f32 %v232, %v201
        %v234 = vadd.f32 %v233, %v202
        %v235 = vadd.f32 %v234, %v203
        %v236 = vadd.f32 %v235, %v204
        %v237 = vadd.f32 %v236, %v205
        %v238 = vadd.f32 %v237, %v206
        %v239 = vadd.f32 %v238, %v207
        %v240 = vadd.f32 %v239, %v208
        %v241 = vadd.f32 %v240, %v209
        %v242 = vadd.f32 %v241, %v210
        %v243 = vadd.f32 %v242, %v211
        %v244 = vadd.f32 %v243, %v212
        %v245 = vadd.f32 %v244, %v213
        %v246 = vadd.f32 %v245, %v214
        %v247 = vadd.f32 %v246, %v215
        %v248 = vadd.f32 %v247, %v216
        %v249 = vadd.f32 %v248, %v217
        %v250 = vadd.f32 %v249, %v218
        %v251 = vadd.f32 %v250, %v219
        %v252 = vadd.f32 %v251, %v220
        %v253 = vadd.f32 %v252, %v221
        %v254 = vadd.f32 %v253, %v222
        %v255 = vadd.f32 %v254, %v223
        %v256 = vadd.f32 %v255, %v224
        %v257 = vadd.f32 %v256, %v225
        %v258 = vadd.f32 %v257, %v226
        %259 = vadd.xlane.f32.xlu0 %v258
        %v260 = vpop.xlane.xlu0 %259
        %v261 = vadd.f32 %v227, %v260
        %vm262 = vcmask 7168
        %263 = vst.msk [vmem:[%s183] sm:$0xff] %vm262, %v261
        %v264 = vld [vmem:[%s187] sm:$0xff]
        %v265 = vmul.f32 %v195, %v195
        %v266 = vmul.f32 %v196, %v196
        %v267 = vmul.f32 %v197, %v197
        %v268 = vmul.f32 %v198, %v198
        %v269 = vmul.f32 %v199, %v199
        %v270 = vmul.f32 %v200, %v200
        %v271 = vmul.f32 %v201, %v201
        %v272 = vmul.f32 %v202, %v202
        %v273 = vmul.f32 %v203, %v203
        %v274 = vmul.f32 %v204, %v204
        %v275 = vmul.f32 %v205, %v205
        %v276 = vmul.f32 %v206, %v206
        %v277 = vmul.f32 %v207, %v207
        %v278 = vmul.f32 %v208, %v208
        %v279 = vmul.f32 %v209, %v209
        %v280 = vmul.f32 %v210, %v210
        %v281 = vmul.f32 %v211, %v211
        %v282 = vmul.f32 %v212, %v212
        %v283 = vmul.f32 %v213, %v213
        %v284 = vmul.f32 %v214, %v214
        %v285 = vmul.f32 %v215, %v215
        %v286 = vmul.f32 %v216, %v216
        %v287 = vmul.f32 %v217, %v217
        %v288 = vmul.f32 %v218, %v218
        %v289 = vmul.f32 %v219, %v219
        %v290 = vmul.f32 %v220, %v220
        %v291 = vmul.f32 %v221, %v221
        %v292 = vmul.f32 %v222, %v222
        %v293 = vmul.f32 %v223, %v223
        %v294 = vmul.f32 %v224, %v224
        %v295 = vmul.f32 %v225, %v225
        %v296 = vmul.f32 %v226, %v226
        %v297 = vadd.f32 %v265, %v266
        %v298 = vadd.f32 %v297, %v267
        %v299 = vadd.f32 %v298, %v268
        %v300 = vadd.f32 %v299, %v269
        %v301 = vadd.f32 %v300, %v270
        %v302 = vadd.f32 %v301, %v271
        %v303 = vadd.f32 %v302, %v272
        %v304 = vadd.f32 %v303, %v273
        %v305 = vadd.f32 %v304, %v274
        %v306 = vadd.f32 %v305, %v275
        %v307 = vadd.f32 %v306, %v276
        %v308 = vadd.f32 %v307, %v277
        %v309 = vadd.f32 %v308, %v278
        %v310 = vadd.f32 %v309, %v279
        %v311 = vadd.f32 %v310, %v280
        %v312 = vadd.f32 %v311, %v281
        %v313 = vadd.f32 %v312, %v282
        %v314 = vadd.f32 %v313, %v283
        %v315 = vadd.f32 %v314, %v284
        %v316 = vadd.f32 %v315, %v285
        %v317 = vadd.f32 %v316, %v286
        %v318 = vadd.f32 %v317, %v287
        %v319 = vadd.f32 %v318, %v288
        %v320 = vadd.f32 %v319, %v289
        %v321 = vadd.f32 %v320, %v290
        %v322 = vadd.f32 %v321, %v291
        %v323 = vadd.f32 %v322, %v292
        %v324 = vadd.f32 %v323, %v293
        %v325 = vadd.f32 %v324, %v294
        %v326 = vadd.f32 %v325, %v295
        %v327 = vadd.f32 %v326, %v296
        %328 = vadd.xlane.f32.xlu0 %v327
        %v329 = vpop.xlane.xlu0 %328
        %v330 = vadd.f32 %v264, %v329
        %331 = vst.msk [vmem:[%s187] sm:$0xff] %vm262, %v330
        %p332 = scmp.lt.s32.totalorder %s21, 1
        %s333 = scalar_select %p332, %s21, 1
        %s334 = smul.addr %s333, 8
        %s335 = scalar_lea.vmem %s1, %s334
        %p336 = scmp.lt.s32.totalorder %s21, 1
        %s337 = scalar_select %p336, %s21, 1
        %s338 = smul.addr %s337, 8
        %s339 = scalar_lea.vmem %s2, %s338
        // Predicated region
        $region33: #{tpu_custom_call.1} parent=23 // pred_check
          %p340 = pneg %p75
        $region34: #{tpu_custom_call.1} parent=23 // pred_check_branch
          %342 = sbr.rel (%p340) target = $region36
        $region35: #{tpu_custom_call.1} parent=23 // pred_region
          _
        $region36: #{tpu_custom_call.1} parent=23 // pred_fallthru
          _
        // Predicated region
        $region37: #{tpu_custom_call.1} parent=23 // pred_check
          %p343 = pneg %p101
        $region38: #{tpu_custom_call.1} parent=23 // pred_check_branch
          %345 = sbr.rel (%p343) target = $region40
        $region39: #{tpu_custom_call.1} parent=23 // pred_region
          _
        $region40: #{tpu_custom_call.1} parent=23 // pred_fallthru
          _
      $region24: #{tpu_custom_call.1} parent=5 // pred_fallthru
        _
      %p346 = scmp.le.s32.totalorder 2, %s12
      // Predicated region
      $region41: #{tpu_custom_call.1} parent=5 // pred_check
        %p347 = pneg %p346
      $region42: #{tpu_custom_call.1} parent=5 // pred_check_branch
        %349 = sbr.rel (%p347) target = $region44
      $region43: #{tpu_custom_call.1} parent=5 // pred_region
        %s350 = ssub.s32 %s12, 2
        // Predicated region
        $region45: #{tpu_custom_call.1} parent=43 // pred_check
          %p351 = pneg %p81
        $region46: #{tpu_custom_call.1} parent=43 // pred_check_branch
          %353 = sbr.rel (%p351) target = $region48
        $region47: #{tpu_custom_call.1} parent=43 // pred_region
          %p354 = scmp.lt.s32.totalorder %s23, 1
          %s355 = scalar_select %p354, %s23, 1
          %s356 = smul.addr %s355, 8
          %s357 = scalar_lea.vmem %s1, %s356
        $region48: #{tpu_custom_call.1} parent=43 // pred_fallthru
          _
        // Predicated region
        $region49: #{tpu_custom_call.1} parent=43 // pred_check
          %p358 = pneg %p107
        $region50: #{tpu_custom_call.1} parent=43 // pred_check_branch
          %360 = sbr.rel (%p358) target = $region52
        $region51: #{tpu_custom_call.1} parent=43 // pred_region
          %p361 = scmp.lt.s32.totalorder %s23, 1
          %s362 = scalar_select %p361, %s23, 1
          %s363 = smul.addr %s362, 8
          %s364 = scalar_lea.vmem %s2, %s363
        $region52: #{tpu_custom_call.1} parent=43 // pred_fallthru
          _
      $region44: #{tpu_custom_call.1} parent=5 // pred_fallthru
        _
    $region6: #{tpu_custom_call.1} parent=1 // loop_footer
      %s16 = sadd.s32 1, %s12
    $region7: #{tpu_custom_call.1} parent=1 // loop_footer_branch
      %11 = sbr.rel target = $region3
    $region8: #{tpu_custom_call.1} parent=1 // loop_exit
      _
    %365 = vsyncpa [#allocation3], 1
    %s366 = scalar_lea.sflag [#allocation3], 1
    %367 = vsyncpa %s366, 1

</llo_original>
